<compile_context>
chip_gen: v5e
topology: v5e:2x2
jax: 0.10.0
libtpu: 0.0.40
codegen_flags: <defaults>
</compile_context>

<pallas_src>
import functools
import math

import jax
import jax.numpy as jnp
from jax.experimental import pallas as pl
from jax.experimental.pallas import tpu as pltpu


# ----------------------------------------------------------------------------
# Small helpers
# ----------------------------------------------------------------------------

def _nbytes(shape, dtype):
    n = 1
    for s in shape:
        n *= int(s)
    return n * jnp.dtype(dtype).itemsize


def _vmem_limit_bytes(block_bytes):
    # 2x for double buffering + headroom, clamped below v7x's 64 MiB physical VMEM.
    return int(min(max(2 * block_bytes + (8 << 20), 32 << 20), 60 << 20))


def _pick_row_tile(n):
    cands = [t for t in (512, 256, 128, 64, 32, 16, 8) if t <= n and n % t == 0]
    for t in cands:
        if n // t >= 2:          # keep >=2 blocks so the parallel axis can shard (v7x)
            return t
    return cands[0] if cands else n


def _pick_lane_tile(n):
    for t in (512, 256, 128):
        if t <= n and n % t == 0:
            return t
    return n


def _pick_k_tile(n):
    for t in (1024, 512, 256):
        if t <= n and n % t == 0:
            return t
    return n


def _pick_heads_per_step(H, dh):
    # Lane-dense head slabs: prefer hsub*dh a multiple of 128 lanes and <= 512
    # wide (keeps the per-step f32 score block modest); fall back to the
    # narrowest lane-aligned divisor, then to all heads.
    divisors = [h for h in range(H, 0, -1) if H % h == 0]
    aligned = [h for h in divisors if (h * dh) % 128 == 0]
    for h in aligned:
        if h * dh <= 512:
            return h
    if aligned:
        return aligned[-1]
    # TODO(synk): D = H*dh not lane-aligned; relies on Mosaic padding of the slab.
    return H


def _pick_kv_tile(L):
    for t in (512, 256, 128):
        if L % t == 0 and t < L:
            return t
    return L


_FLASH_SCORE_BUDGET = 8 * 1024 * 1024        # f32 bytes of a dense score block
_RESIDENT_WEIGHT_LIMIT = 12 * 1024 * 1024    # above this, stream the weight (K-tiled)


# ----------------------------------------------------------------------------
# Fused row-wise linear:  [LayerNorm] -> matmul (resident weight) -> bias
#                         -> [QuickGELU] -> [+residual]
# ----------------------------------------------------------------------------

def _row_linear_kernel(*refs, ln, activation, residual):
    idx = 0
    x_ref = refs[idx]; idx += 1
    if ln:
        g_ref, b_ref = refs[idx], refs[idx + 1]; idx += 2
    w_ref = refs[idx]; idx += 1
    bias_ref = refs[idx]; idx += 1
    if residual:
        res_ref = refs[idx]; idx += 1
    o_ref = refs[idx]

    x = x_ref[...]
    if ln:
        xf = x.astype(jnp.float32)
        mean = jnp.mean(xf, axis=-1, keepdims=True)
        var = jnp.mean(jnp.square(xf - mean), axis=-1, keepdims=True)
        xn = (xf - mean) * jax.lax.rsqrt(var + 1e-5)
        xn = xn * g_ref[...].astype(jnp.float32) + b_ref[...].astype(jnp.float32)
        x = xn.astype(x_ref.dtype)            # MXU operands stay in activation dtype
    y = jnp.dot(x, w_ref[...], preferred_element_type=jnp.float32)
    y = y + bias_ref[...].astype(jnp.float32)
    if activation == "quick_gelu":
        y = y * (1.0 / (1.0 + jnp.exp(-1.702 * y)))   # x * sigmoid(1.702 x)
    if residual:
        y = y + res_ref[...].astype(jnp.float32)
    o_ref[...] = y.astype(o_ref.dtype)


def row_linear(x2d, w, bias, *, gamma=None, beta=None, residual=None, activation=None):
    N, Din = x2d.shape
    Dout = w.shape[1]
    tm = _pick_row_tile(N)
    ln = gamma is not None
    has_res = residual is not None

    args = [x2d]
    in_specs = [pl.BlockSpec((tm, Din), lambda i: (i, 0))]
    if ln:
        args += [gamma.reshape(1, Din), beta.reshape(1, Din)]
        in_specs += [pl.BlockSpec((1, Din), lambda i: (0, 0)),
                     pl.BlockSpec((1, Din), lambda i: (0, 0))]
    args += [w, bias.reshape(1, Dout)]
    in_specs += [pl.BlockSpec((Din, Dout), lambda i: (0, 0)),   # resident: fetched once
                 pl.BlockSpec((1, Dout), lambda i: (0, 0))]
    if has_res:
        args.append(residual)
        in_specs.append(pl.BlockSpec((tm, Dout), lambda i: (i, 0)))

    blk = (_nbytes((tm, Din), x2d.dtype) + _nbytes((Din, Dout), w.dtype)
           + _nbytes((tm, Dout), x2d.dtype) * (2 if has_res else 1)
           + _nbytes((1, Dout), bias.dtype))
    return pl.pallas_call(
        functools.partial(_row_linear_kernel, ln=ln, activation=activation,
                          residual=has_res),
        out_shape=jax.ShapeDtypeStruct((N, Dout), x2d.dtype),
        grid=(N // tm,),
        in_specs=in_specs,
        out_specs=pl.BlockSpec((tm, Dout), lambda i: (i, 0)),
        compiler_params=pltpu.CompilerParams(
            dimension_semantics=("parallel",),
            vmem_limit_bytes=_vmem_limit_bytes(blk)),
    )(*args)


# K-tiled fallback (weight too large to keep resident).  Epilogue fuses bias +
# residual.  (If the profile shows exposed DMA on the k axis, the weight spec
# could additionally use pipeline_mode=pl.Buffered(3).)
def _linear_residual_ktiled_kernel(x_ref, w_ref, bias_ref, res_ref, o_ref, acc_ref):
    k = pl.program_id(2)

    @pl.when(k == 0)
    def _():
        acc_ref[...] = jnp.zeros_like(acc_ref)

    acc_ref[...] += jnp.dot(x_ref[...], w_ref[...], preferred_element_type=jnp.float32)

    @pl.when(k == pl.num_programs(2) - 1)
    def _():
        y = acc_ref[...] + bias_ref[...].astype(jnp.float32) + res_ref[...].astype(jnp.float32)
        o_ref[...] = y.astype(o_ref.dtype)


def _linear_residual_ktiled(x2d, w, bias, res):
    N, Din = x2d.shape
    Dout = w.shape[1]
    tm = _pick_row_tile(N)
    tn = _pick_lane_tile(Dout)
    tk = _pick_k_tile(Din)
    blk = (_nbytes((tm, tk), x2d.dtype) + _nbytes((tk, tn), w.dtype)
           + 2 * _nbytes((tm, tn), x2d.dtype) + _nbytes((tm, tn), jnp.float32))
    return pl.pallas_call(
        _linear_residual_ktiled_kernel,
        out_shape=jax.ShapeDtypeStruct((N, Dout), x2d.dtype),
        grid=(N // tm, Dout // tn, Din // tk),
        in_specs=[
            pl.BlockSpec((tm, tk), lambda i, j, k: (i, k)),
            pl.BlockSpec((tk, tn), lambda i, j, k: (k, j)),
            pl.BlockSpec((1, tn), lambda i, j, k: (0, j)),
            pl.BlockSpec((tm, tn), lambda i, j, k: (i, j)),
        ],
        out_specs=pl.BlockSpec((tm, tn), lambda i, j, k: (i, j)),
        scratch_shapes=[pltpu.VMEM((tm, tn), jnp.float32)],
        compiler_params=pltpu.CompilerParams(
            dimension_semantics=("parallel", "parallel", "arbitrary"),
            vmem_limit_bytes=_vmem_limit_bytes(blk)),
    )(x2d, w, bias.reshape(1, Dout), res)


def linear_residual(x2d, w, bias, res):
    if _nbytes(w.shape, w.dtype) <= _RESIDENT_WEIGHT_LIMIT:
        return row_linear(x2d, w, bias, residual=res)
    return _linear_residual_ktiled(x2d, w, bias, res)


# ----------------------------------------------------------------------------
# Attention over (L, hsub*dh) column slabs of the fused qkv buffer.
# The 1/sqrt(dh) scale is already folded into the q projection weights.
# ----------------------------------------------------------------------------

def _attn_dense_kernel(*refs, hsub, dh, has_mask):
    if has_mask:
        q_ref, k_ref, v_ref, m_ref, o_ref = refs
    else:
        q_ref, k_ref, v_ref, o_ref = refs
        m_ref = None
    L = q_ref.shape[0]
    qh = q_ref[...].reshape(L, hsub, dh).transpose(1, 0, 2)   # (h, L, dh)
    kh = k_ref[...].reshape(L, hsub, dh).transpose(1, 0, 2)
    vh = v_ref[...].reshape(L, hsub, dh).transpose(1, 0, 2)
    s = jnp.einsum("hqd,hkd->hqk", qh, kh, preferred_element_type=jnp.float32)
    if m_ref is not None:
        s = s + m_ref[...].astype(jnp.float32)                # broadcast over heads
    s = s - jnp.max(s, axis=-1, keepdims=True)
    p = jnp.exp(s)
    p = p * pl.reciprocal(jnp.sum(p, axis=-1, keepdims=True), approx=True)
    o = jnp.einsum("hqk,hkd->hqd", p.astype(vh.dtype), vh,
                   preferred_element_type=jnp.float32)        # (h, L, dh)
    o_ref[...] = o.transpose(1, 0, 2).reshape(L, hsub * dh).astype(o_ref.dtype)


def _attn_flash_kernel(*refs, hsub, dh, has_mask):
    if has_mask:
        q_ref, k_ref, v_ref, m_ref, o_ref, m_sc, l_sc, acc_sc = refs
    else:
        q_ref, k_ref, v_ref, o_ref, m_sc, l_sc, acc_sc = refs
        m_ref = None
    kvi = pl.program_id(2)
    L = q_ref.shape[0]
    tkv = k_ref.shape[0]

    @pl.when(kvi == 0)
    def _():
        m_sc[...] = jnp.full_like(m_sc, -jnp.inf)
        l_sc[...] = jnp.zeros_like(l_sc)
        acc_sc[...] = jnp.zeros_like(acc_sc)

    qh = q_ref[...].reshape(L, hsub, dh).transpose(1, 0, 2)     # (h, L, dh)
    kh = k_ref[...].reshape(tkv, hsub, dh).transpose(1, 0, 2)   # (h, tkv, dh)
    vh = v_ref[...].reshape(tkv, hsub, dh).transpose(1, 0, 2)
    s = jnp.einsum("hqd,hkd->hqk", qh, kh, preferred_element_type=jnp.float32)
    if m_ref is not None:
        s = s + m_ref[...].astype(jnp.float32)
    m_new = jnp.maximum(m_sc[...], jnp.max(s, axis=-1, keepdims=True))
    a = jnp.exp(m_sc[...] - m_new)
    p = jnp.exp(s - m_new)
    l_sc[...] = a * l_sc[...] + jnp.sum(p, axis=-1, keepdims=True)
    acc_sc[...] = a * acc_sc[...] + jnp.einsum("hqk,hkd->hqd", p.astype(vh.dtype), vh,
                                               preferred_element_type=jnp.float32)
    m_sc[...] = m_new

    @pl.when(kvi == pl.num_programs(2) - 1)
    def _():
        o = acc_sc[...] * pl.reciprocal(l_sc[...], approx=True)
        o_ref[...] = o.transpose(1, 0, 2).reshape(L, hsub * dh).astype(o_ref.dtype)


def mha_attention(qkv, *, B, L, H, dh, attn_mask=None):
    """qkv: (B*L, 3*D) batch-major rows, columns [q | k | v].  Returns (B*L, D)."""
    D = H * dh
    hsub = _pick_heads_per_step(H, dh)
    G = H // hsub
    wcol = hsub * dh

    if attn_mask is not None and attn_mask.dtype == jnp.bool_:
        # torch semantics: True = masked out -> additive -inf
        attn_mask = jnp.where(attn_mask, -1e30, 0.0).astype(jnp.float32)
    has_mask = attn_mask is not None

    tkv = _pick_kv_tile(L)
    use_flash = (4 * hsub * L * L > _FLASH_SCORE_BUDGET) and tkv < L

    qdt = qkv.dtype
    if not use_flash:
        in_specs = [pl.BlockSpec((L, wcol), lambda b, g: (b, g)),
                    pl.BlockSpec((L, wcol), lambda b, g: (b, G + g)),
                    pl.BlockSpec((L, wcol), lambda b, g: (b, 2 * G + g))]
        args = [qkv, qkv, qkv]
        if has_mask:
            in_specs.append(pl.BlockSpec((L, L), lambda b, g: (0, 0)))
            args.append(attn_mask)
        blk = 4 * _nbytes((L, wcol), qdt) + 4 * hsub * L * L
        return pl.pallas_call(
            functools.partial(_attn_dense_kernel, hsub=hsub, dh=dh, has_mask=has_mask),
            out_shape=jax.ShapeDtypeStruct((B * L, D), qdt),
            grid=(B, G),
            in_specs=in_specs,
            out_specs=pl.BlockSpec((L, wcol), lambda b, g: (b, g)),
            compiler_params=pltpu.CompilerParams(
                dimension_semantics=("parallel", "parallel"),
                vmem_limit_bytes=_vmem_limit_bytes(blk)),
        )(*args)

    # Flash-tiled path: kv axis is the (arbitrary) reduction axis of the grid.
    nkv = L // tkv
    in_specs = [pl.BlockSpec((L, wcol), lambda b, g, t: (b, g)),
                pl.BlockSpec((tkv, wcol), lambda b, g, t: (b * nkv + t, G + g)),
                pl.BlockSpec((tkv, wcol), lambda b, g, t: (b * nkv + t, 2 * G + g))]
    args = [qkv, qkv, qkv]
    if has_mask:
        in_specs.append(pl.BlockSpec((L, tkv), lambda b, g, t: (0, t)))
        args.append(attn_mask)
    blk = (2 * _nbytes((L, wcol), qdt) + 2 * _nbytes((tkv, wcol), qdt)
           + 4 * hsub * L * (tkv + dh + 2))
    return pl.pallas_call(
        functools.partial(_attn_flash_kernel, hsub=hsub, dh=dh, has_mask=has_mask),
        out_shape=jax.ShapeDtypeStruct((B * L, D), qdt),
        grid=(B, G, nkv),
        in_specs=in_specs,
        out_specs=pl.BlockSpec((L, wcol), lambda b, g, t: (b, g)),
        scratch_shapes=[pltpu.VMEM((hsub, L, 1), jnp.float32),
                        pltpu.VMEM((hsub, L, 1), jnp.float32),
                        pltpu.VMEM((hsub, L, dh), jnp.float32)],
        compiler_params=pltpu.CompilerParams(
            dimension_semantics=("parallel", "parallel", "arbitrary"),
            vmem_limit_bytes=_vmem_limit_bytes(blk)),
    )(*args)


# ----------------------------------------------------------------------------
# ResidualAttentionBlock / Transformer forward (glue in plain JAX)
# ----------------------------------------------------------------------------

def resblock_forward(x_bm, p, B, L, attn_mask=None):
    """x_bm: (B*L, D) batch-major rows."""
    D = x_bm.shape[-1]
    H = p["heads"]
    dh = D // H

    # --- x + attention(ln_1(x)) ---------------------------------------------
    qkv = row_linear(x_bm, p["in_proj_w"], p["in_proj_b"],
                     gamma=p["ln1_g"], beta=p["ln1_b"])           # LN fused into in_proj
    attn = mha_attention(qkv, B=B, L=L, H=H, dh=dh, attn_mask=attn_mask)
    x_bm = linear_residual(attn, p["out_proj_w"], p["out_proj_b"], x_bm)
    # TODO(synk): ViM adapter (vim_att) class is not provided in the source; treated as zero contribution.

    # --- x + mlp(ln_2(x)) -----------------------------------------------------
    h = row_linear(x_bm, p["fc_w"], p["fc_b"],
                   gamma=p["ln2_g"], beta=p["ln2_b"], activation="quick_gelu")
    x_bm = linear_residual(h, p["proj_w"], p["proj_b"], x_bm)
    # TODO(synk): ViM adapter (vim_mlp) class is not provided in the source; treated as zero contribution.
    return x_bm


def transformer_forward(x, layer_params, attn_mask=None):
    """Reproduces Transformer.forward: returns a list with the output of each block
    (each in the module's (L, B, D) layout)."""
    L, B, D = x.shape
    # One transpose to batch-major at entry; the residual chain stays batch-major.
    x_bm = jnp.transpose(x, (1, 0, 2)).reshape(B * L, D)
    features = []
    for p in layer_params:
        x_bm = resblock_forward(x_bm, p, B, L, attn_mask)
        features.append(jnp.transpose(x_bm.reshape(B, L, D), (1, 0, 2)))
    return features


# ----------------------------------------------------------------------------
# Deterministic parameter initialization (weights stored pre-transposed (in, out))
# ----------------------------------------------------------------------------

def init_block_params(key, width, heads, dtype=jnp.bfloat16):
    D = width
    dh = D // heads
    ks = jax.random.split(key, 6)
    s = 0.02
    in_proj_w = jax.random.normal(ks[0], (D, 3 * D)) * s
    in_proj_b = jnp.zeros((3 * D,), jnp.float32)
    # Fold the 1/sqrt(dh) attention scale into the q slice of the qkv projection
    # (free at runtime; removes a VPU multiply from the attention kernel).
    scale = 1.0 / math.sqrt(dh)
    in_proj_w = in_proj_w.at[:, :D].multiply(scale)
    in_proj_b = in_proj_b.at[:D].multiply(scale)
    return {
        "heads": heads,
        "ln1_g": jnp.ones((D,), dtype), "ln1_b": jnp.zeros((D,), dtype),
        "ln2_g": jnp.ones((D,), dtype), "ln2_b": jnp.zeros((D,), dtype),
        "in_proj_w": in_proj_w.astype(dtype),
        "in_proj_b": in_proj_b.astype(dtype),
        "out_proj_w": (jax.random.normal(ks[1], (D, D)) * s).astype(dtype),
        "out_proj_b": jnp.zeros((D,), dtype),
        "fc_w": (jax.random.normal(ks[2], (D, 4 * D)) * s).astype(dtype),
        "fc_b": (jax.random.normal(ks[3], (4 * D,)) * s).astype(dtype),
        "proj_w": (jax.random.normal(ks[4], (4 * D, D)) * s).astype(dtype),
        "proj_b": (jax.random.normal(ks[5], (D,)) * s).astype(dtype),
    }


# ----------------------------------------------------------------------------

if __name__ == "__main__":
    # Small, TPU-friendly demo shape: seq=8, batch=2, width=256, heads=2 (dh=128).
    L, B, D, heads, layers = 8, 2, 256, 2, 2
    dtype = jnp.bfloat16   # bf16 activations/weights (MXU fast path); f32 stats/accum.

    root = jax.random.PRNGKey(0)
    kx, *kl = jax.random.split(root, layers + 1)
    x = jax.random.normal(kx, (L, B, D), dtype=jnp.float32).astype(dtype)
    layer_params = [init_block_params(k, D, heads, dtype=dtype) for k in kl]

    feats = transformer_forward(x, layer_params, attn_mask=None)
    feats = [jax.block_until_ready(f) for f in feats]

    assert len(feats) == layers
    for f in feats:
        assert f.shape == (L, B, D)
        assert bool(jnp.all(jnp.isfinite(f.astype(jnp.float32))))
    print("KERNEL_OK")
</pallas_src>

<mosaic_0001>
module attributes {stable_mosaic.version = 11 : i64} {
  func.func @_row_linear_kernel(%arg0: i32, %arg1: memref<8x256xbf16, #tpu.memory_space<vmem>>, %arg2: memref<1x256xbf16, #tpu.memory_space<vmem>>, %arg3: memref<1x256xbf16, #tpu.memory_space<vmem>>, %arg4: memref<256x768xbf16, #tpu.memory_space<vmem>>, %arg5: memref<1x768xbf16, #tpu.memory_space<vmem>>, %arg6: memref<8x768xbf16, #tpu.memory_space<vmem>>) attributes {dimension_semantics = [#tpu.dimension_semantics<parallel>], iteration_bounds = array<i64: 2>, scalar_prefetch = 0 : i64, scratch_operands = 0 : i64, tpu.core_type = #tpu.core_type<tc>, window_params = [{transform_indices = @transform_0, window_bounds = array<i64: 8, 256>}, {pipeline_mode = #tpu.pipeline_mode<synchronous>, transform_indices = @transform_1, window_bounds = array<i64: 1, 256>}, {pipeline_mode = #tpu.pipeline_mode<synchronous>, transform_indices = @transform_2, window_bounds = array<i64: 1, 256>}, {pipeline_mode = #tpu.pipeline_mode<synchronous>, transform_indices = @transform_3, window_bounds = array<i64: 256, 768>}, {pipeline_mode = #tpu.pipeline_mode<synchronous>, transform_indices = @transform_4, window_bounds = array<i64: 1, 768>}, {transform_indices = @transform_5, window_bounds = array<i64: 8, 768>}]} {
    %c0 = arith.constant 0 : index
    %c0_0 = arith.constant 0 : index
    %0 = vector.load %arg1[%c0, %c0_0] : memref<8x256xbf16, #tpu.memory_space<vmem>>, vector<8x256xbf16>
    %1 = arith.extf %0 : vector<8x256xbf16> to vector<8x256xf32>
    %cst = arith.constant dense<0.000000e+00> : vector<8xf32>
    %2 = vector.multi_reduction <add>, %1, %cst [1] : vector<8x256xf32> to vector<8xf32>
    %3 = vector.shape_cast %2 : vector<8xf32> to vector<8x1xf32>
    %cst_1 = arith.constant 2.560000e+02 : f32
    %4 = vector.broadcast %cst_1 : f32 to vector<8x1xf32>
    %5 = arith.divf %3, %4 : vector<8x1xf32>
    %6 = vector.broadcast %5 : vector<8x1xf32> to vector<8x256xf32>
    %7 = arith.subf %1, %6 : vector<8x256xf32>
    %8 = arith.mulf %7, %7 : vector<8x256xf32>
    %cst_2 = arith.constant dense<0.000000e+00> : vector<8xf32>
    %9 = vector.multi_reduction <add>, %8, %cst_2 [1] : vector<8x256xf32> to vector<8xf32>
    %10 = vector.shape_cast %9 : vector<8xf32> to vector<8x1xf32>
    %cst_3 = arith.constant 2.560000e+02 : f32
    %11 = vector.broadcast %cst_3 : f32 to vector<8x1xf32>
    %12 = arith.divf %10, %11 : vector<8x1xf32>
    %13 = vector.broadcast %5 : vector<8x1xf32> to vector<8x256xf32>
    %14 = arith.subf %1, %13 : vector<8x256xf32>
    %cst_4 = arith.constant 9.99999974E-6 : f32
    %15 = vector.broadcast %cst_4 : f32 to vector<8x1xf32>
    %16 = arith.addf %12, %15 : vector<8x1xf32>
    %17 = math.rsqrt %16 : vector<8x1xf32>
    %18 = vector.broadcast %17 : vector<8x1xf32> to vector<8x256xf32>
    %19 = arith.mulf %14, %18 : vector<8x256xf32>
    %c0_5 = arith.constant 0 : index
    %c0_6 = arith.constant 0 : index
    %20 = vector.load %arg2[%c0_5, %c0_6] : memref<1x256xbf16, #tpu.memory_space<vmem>>, vector<1x256xbf16>
    %21 = arith.extf %20 : vector<1x256xbf16> to vector<1x256xf32>
    %22 = vector.broadcast %21 : vector<1x256xf32> to vector<8x256xf32>
    %23 = arith.mulf %19, %22 : vector<8x256xf32>
    %c0_7 = arith.constant 0 : index
    %c0_8 = arith.constant 0 : index
    %24 = vector.load %arg3[%c0_7, %c0_8] : memref<1x256xbf16, #tpu.memory_space<vmem>>, vector<1x256xbf16>
    %25 = arith.extf %24 : vector<1x256xbf16> to vector<1x256xf32>
    %26 = vector.broadcast %25 : vector<1x256xf32> to vector<8x256xf32>
    %27 = arith.addf %23, %26 : vector<8x256xf32>
    %28 = arith.truncf %27 : vector<8x256xf32> to vector<8x256xbf16>
    %c0_9 = arith.constant 0 : index
    %c0_10 = arith.constant 0 : index
    %29 = vector.load %arg4[%c0_9, %c0_10] : memref<256x768xbf16, #tpu.memory_space<vmem>>, vector<256x768xbf16>
    %cst_11 = arith.constant dense<0.000000e+00> : vector<8x768xf32>
    %30 = tpu.matmul %28, %29, %cst_11 {dimension_numbers = #tpu.dot_dimension_numbers<[1], [0], [0], [1], [0, 0, 1, 1], [], []>} : vector<8x256xbf16>, vector<256x768xbf16>, vector<8x768xf32> -> vector<8x768xf32>
    %c0_12 = arith.constant 0 : index
    %c0_13 = arith.constant 0 : index
    %31 = vector.load %arg5[%c0_12, %c0_13] : memref<1x768xbf16, #tpu.memory_space<vmem>>, vector<1x768xbf16>
    %32 = arith.extf %31 : vector<1x768xbf16> to vector<1x768xf32>
    %33 = vector.broadcast %32 : vector<1x768xf32> to vector<8x768xf32>
    %34 = arith.addf %30, %33 : vector<8x768xf32>
    %35 = arith.truncf %34 : vector<8x768xf32> to vector<8x768xbf16>
    %c0_14 = arith.constant 0 : index
    %c0_15 = arith.constant 0 : index
    %36 = vector.load %arg6[%c0_14, %c0_15] : memref<8x768xbf16, #tpu.memory_space<vmem>>, vector<8x768xbf16>
    tpu.vector_store %arg6[%c0_14, %c0_15], %35 {strides = array<i32>} : memref<8x768xbf16, #tpu.memory_space<vmem>>, vector<8x768xbf16>,
    return
  }
  func.func @transform_0(%arg0: i32) -> (i32, i32) {
    %c0_i32 = arith.constant 0 : i32
    %c0_i32_0 = arith.constant 0 : i32
    return %arg0, %c0_i32 : i32, i32
  }
  func.func @transform_1(%arg0: i32) -> (i32, i32) {
    %c0_i32 = arith.constant 0 : i32
    %c0_i32_0 = arith.constant 0 : i32
    %c0_i32_1 = arith.constant 0 : i32
    return %c0_i32, %c0_i32_0 : i32, i32
  }
  func.func @transform_2(%arg0: i32) -> (i32, i32) {
    %c0_i32 = arith.constant 0 : i32
    %c0_i32_0 = arith.constant 0 : i32
    %c0_i32_1 = arith.constant 0 : i32
    return %c0_i32, %c0_i32_0 : i32, i32
  }
  func.func @transform_3(%arg0: i32) -> (i32, i32) {
    %c0_i32 = arith.constant 0 : i32
    %c0_i32_0 = arith.constant 0 : i32
    %c0_i32_1 = arith.constant 0 : i32
    return %c0_i32, %c0_i32_0 : i32, i32
  }
  func.func @transform_4(%arg0: i32) -> (i32, i32) {
    %c0_i32 = arith.constant 0 : i32
    %c0_i32_0 = arith.constant 0 : i32
    %c0_i32_1 = arith.constant 0 : i32
    return %c0_i32, %c0_i32_0 : i32, i32
  }
  func.func @transform_5(%arg0: i32) -> (i32, i32) {
    %c0_i32 = arith.constant 0 : i32
    %c0_i32_0 = arith.constant 0 : i32
    return %arg0, %c0_i32 : i32, i32
  }
}

</mosaic_0001>

<llo_original>
// kernel: tpu_custom_call.1
$region0: #{tpu_custom_call.1}
  #allocation0 [shape = 'u32[]', space=smem, size = 0x4, offset = 0x4, fixed_abs, tag = 'smem constant byte address 0x4 - core index']
  #allocation1 [shape = 'u32[72,128]{1,0:T(1,128)}', space=vmem, size = 0x9000, scoped, tag = 'internal scratch']
  %s0 = inlined_call_operand.hbm [shape: bf16[16,256], index: 0, kind: input, shape index: {}]
  %s1 = inlined_call_operand.hbm [shape: bf16[1,256], index: 1, kind: input, shape index: {}]
  %s2 = inlined_call_operand.hbm [shape: bf16[1,256], index: 2, kind: input, shape index: {}]
  %s3 = inlined_call_operand.hbm [shape: bf16[256,768], index: 3, kind: input, shape index: {}]
  %s4 = inlined_call_operand.hbm [shape: bf16[1,768], index: 4, kind: input, shape index: {}]
  %s5 = inlined_call_operand.hbm [shape: bf16[16,768], index: 5, kind: output, shape index: {}]
  %s6 = sld [smem:[#allocation0]]
  $region73: #{tpu_custom_call.1} parent=0
    _
  %s8 = ssub.s32 1, %s6
  %s9 = scalar_select 0, %s8, %s6
  $region1: #{tpu_custom_call.1} parent=0
    #allocation2 [shape = 'u8[8192]{0}', space=vmem, size = 0x2000, scoped, tag = 'input window, operand 0']
    #allocation3 [shape = 's32[2]{0}', space=sflag, size = 0x8, scoped, tag = 'scoped memory for tpu_custom_call.1']
    #allocation4 [shape = 's32[2]{0}', space=sflag, size = 0x8, scoped, tag = 'scoped memory for tpu_custom_call.1']
    #allocation5 [shape = 'u8[1024]{0}', space=vmem, size = 0x400, scoped, tag = 'input window, operand 1, single buffered']
    #allocation6 [shape = 's32[1]{0}', space=sflag, size = 0x4, scoped, tag = 'scoped memory for tpu_custom_call.1']
    #allocation7 [shape = 'u8[1024]{0}', space=vmem, size = 0x400, scoped, tag = 'input window, operand 2, single buffered']
    #allocation8 [shape = 'u8[393216]{0}', space=vmem, size = 0x60000, scoped, tag = 'input window, operand 3, single buffered']
    #allocation9 [shape = 's32[1]{0}', space=sflag, size = 0x4, scoped, tag = 'scoped memory for tpu_custom_call.1']
    #allocation10 [shape = 'u8[3072]{0}', space=vmem, size = 0xc00, scoped, tag = 'input window, operand 4, single buffered']
    #allocation11 [shape = 'u8[24576]{0}', space=vmem, size = 0x6000, scoped, tag = 'output window, operand 0']
    %10 = vsyncpa [#allocation3], 0
    %s11 = scalar_lea.sflag [#allocation3], 1
    %12 = vsyncpa %s11, 0
    %13 = vsyncpa [#allocation6], 0
    %14 = vsyncpa [#allocation9], 0
    %15 = vsyncpa [#allocation4], 0
    %s16 = scalar_lea.sflag [#allocation4], 1
    %17 = vsyncpa %s16, 0
    loop: start=0, step=1, limit=4
    $region2: #{tpu_custom_call.1} parent=1 // loop_pre_header
      _
    $region3: #{tpu_custom_call.1} parent=1 // loop_header
      %s19 = sphi 0, %s23
      %p20 = scmp.ge.s32.totalorder %s19, 4
      %s29 = sphi 0, %s31
      %s32 = sphi 0, %s29
      %s33 = sphi 0, %s32
      %s49 = sphi 0, %s33
      %s53 = sphi 0, %s53
      %s55 = sphi 0, %s53
      %s56 = sphi 0, %s55
      %s70 = sphi 0, %s56
      %s74 = sphi 0, %s74
      %s76 = sphi 0, %s74
      %s77 = sphi 0, %s76
      %s91 = sphi 0, %s77
      %s95 = sphi 0, %s95
      %s97 = sphi 0, %s95
      %s98 = sphi 0, %s97
      %s112 = sphi 0, %s98
      %s116 = sphi 0, %s116
      %s118 = sphi 0, %s116
      %s119 = sphi 0, %s118
      %s133 = sphi 0, %s119
      %s139 = sphi 0, %s141
      %s142 = sphi 0, %s139
      %s143 = sphi 0, %s142
      %s159 = sphi 0, %s143
    $region4: #{tpu_custom_call.1} parent=1 // loop_header_branch
      %22 = sbr.rel (%p20) target = $region8
    $region5: #{tpu_custom_call.1} parent=1 // loop_body
      %s24 = ssub.s32 %s19, 1
      %s25 = ssub.s32 %s19, 2
      %s26 = sadd.s32 %s19, 1
      %s27 = ssub.s32 %s19, %s26
      %p28 = scmp.eq.s32.totalorder %s27, 0
      %s30 = sadd.s32 %s29, 1
      %s31 = scalar_select %p28, %s29, %s30
      %p34 = pneg %p28
      %p35 = scmp.eq.s32.totalorder %s19, 1
      %p36 = por %p34, %p35
      %p37 = scmp.ne.s32.totalorder %s29, %s32
      %p38 = scmp.eq.s32.totalorder %s19, 0
      %p39 = por %p37, %p38
      %p40 = scmp.ne.s32.totalorder %s29, %s32
      %p41 = scmp.eq.s32.totalorder %s24, 1
      %p42 = por %p40, %p41
      %p43 = scmp.ne.s32.totalorder %s32, %s33
      %p44 = scmp.eq.s32.totalorder %s24, 0
      %p45 = por %p43, %p44
      %p46 = scmp.ne.s32.totalorder %s32, %s33
      %p47 = scmp.eq.s32.totalorder %s25, 1
      %p48 = por %p46, %p47
      %p50 = scmp.ne.s32.totalorder %s33, %s49
      %p51 = scmp.eq.s32.totalorder %s25, 0
      %p52 = por %p50, %p51
      %s54 = sadd.s32 %s53, 1
      %p57 = scmp.eq.s32.totalorder %s19, 1
      %p58 = scmp.ne.s32.totalorder %s53, %s55
      %p59 = scmp.eq.s32.totalorder %s19, 0
      %p60 = por %p58, %p59
      %p61 = scmp.ne.s32.totalorder %s53, %s55
      %p62 = scmp.eq.s32.totalorder %s24, 1
      %p63 = por %p61, %p62
      %p64 = scmp.ne.s32.totalorder %s55, %s56
      %p65 = scmp.eq.s32.totalorder %s24, 0
      %p66 = por %p64, %p65
      %p67 = scmp.ne.s32.totalorder %s55, %s56
      %p68 = scmp.eq.s32.totalorder %s25, 1
      %p69 = por %p67, %p68
      %p71 = scmp.ne.s32.totalorder %s56, %s70
      %p72 = scmp.eq.s32.totalorder %s25, 0
      %p73 = por %p71, %p72
      %s75 = sadd.s32 %s74, 1
      %p78 = scmp.eq.s32.totalorder %s19, 1
      %p79 = scmp.ne.s32.totalorder %s74, %s76
      %p80 = scmp.eq.s32.totalorder %s19, 0
      %p81 = por %p79, %p80
      %p82 = scmp.ne.s32.totalorder %s74, %s76
      %p83 = scmp.eq.s32.totalorder %s24, 1
      %p84 = por %p82, %p83
      %p85 = scmp.ne.s32.totalorder %s76, %s77
      %p86 = scmp.eq.s32.totalorder %s24, 0
      %p87 = por %p85, %p86
      %p88 = scmp.ne.s32.totalorder %s76, %s77
      %p89 = scmp.eq.s32.totalorder %s25, 1
      %p90 = por %p88, %p89
      %p92 = scmp.ne.s32.totalorder %s77, %s91
      %p93 = scmp.eq.s32.totalorder %s25, 0
      %p94 = por %p92, %p93
      %s96 = sadd.s32 %s95, 1
      %p99 = scmp.eq.s32.totalorder %s19, 1
      %p100 = scmp.ne.s32.totalorder %s95, %s97
      %p101 = scmp.eq.s32.totalorder %s19, 0
      %p102 = por %p100, %p101
      %p103 = scmp.ne.s32.totalorder %s95, %s97
      %p104 = scmp.eq.s32.totalorder %s24, 1
      %p105 = por %p103, %p104
      %p106 = scmp.ne.s32.totalorder %s97, %s98
      %p107 = scmp.eq.s32.totalorder %s24, 0
      %p108 = por %p106, %p107
      %p109 = scmp.ne.s32.totalorder %s97, %s98
      %p110 = scmp.eq.s32.totalorder %s25, 1
      %p111 = por %p109, %p110
      %p113 = scmp.ne.s32.totalorder %s98, %s112
      %p114 = scmp.eq.s32.totalorder %s25, 0
      %p115 = por %p113, %p114
      %s117 = sadd.s32 %s116, 1
      %p120 = scmp.eq.s32.totalorder %s19, 1
      %p121 = scmp.ne.s32.totalorder %s116, %s118
      %p122 = scmp.eq.s32.totalorder %s19, 0
      %p123 = por %p121, %p122
      %p124 = scmp.ne.s32.totalorder %s116, %s118
      %p125 = scmp.eq.s32.totalorder %s24, 1
      %p126 = por %p124, %p125
      %p127 = scmp.ne.s32.totalorder %s118, %s119
      %p128 = scmp.eq.s32.totalorder %s24, 0
      %p129 = por %p127, %p128
      %p130 = scmp.ne.s32.totalorder %s118, %s119
      %p131 = scmp.eq.s32.totalorder %s25, 1
      %p132 = por %p130, %p131
      %p134 = scmp.ne.s32.totalorder %s119, %s133
      %p135 = scmp.eq.s32.totalorder %s25, 0
      %p136 = por %p134, %p135
      %s137 = ssub.s32 %s19, %s26
      %p138 = scmp.eq.s32.totalorder %s137, 0
      %s140 = sadd.s32 %s139, 1
      %s141 = scalar_select %p138, %s139, %s140
      %p144 = pneg %p138
      %p145 = scmp.eq.s32.totalorder %s19, 1
      %p146 = por %p144, %p145
      %p147 = scmp.ne.s32.totalorder %s139, %s142
      %p148 = scmp.eq.s32.totalorder %s19, 0
      %p149 = por %p147, %p148
      %p150 = scmp.ne.s32.totalorder %s139, %s142
      %p151 = scmp.eq.s32.totalorder %s24, 1
      %p152 = por %p150, %p151
      %p153 = scmp.ne.s32.totalorder %s142, %s143
      %p154 = scmp.eq.s32.totalorder %s24, 0
      %p155 = por %p153, %p154
      %p156 = scmp.ne.s32.totalorder %s142, %s143
      %p157 = scmp.eq.s32.totalorder %s25, 1
      %p158 = por %p156, %p157
      %p160 = scmp.ne.s32.totalorder %s143, %s159
      %p161 = scmp.eq.s32.totalorder %s25, 0
      %p162 = por %p160, %p161
      %p163 = scmp.le.s32.totalorder 1, %s19
      %p164 = scmp.lt.s32.totalorder %s19, 3
      %p165 = pnand %p163, %p164
      %p166 = pneg %p165
      // Predicated region
      $region9: #{tpu_custom_call.1} parent=5 // pred_check
        _
      $region10: #{tpu_custom_call.1} parent=5 // pred_check_branch
        %168 = sbr.rel (%p165) target = $region12
      $region11: #{tpu_custom_call.1} parent=5 // pred_region
        %s169 = ssub.s32 %s19, 1
        // Predicated region
        $region13: #{tpu_custom_call.1} parent=11 // pred_check
          %p170 = pneg %p66
        $region14: #{tpu_custom_call.1} parent=11 // pred_check_branch
          %172 = sbr.rel (%p170) target = $region16
        $region15: #{tpu_custom_call.1} parent=11 // pred_region
          %174 = vsyncadd [#allocation6], 0
          %s176 = sshll.u32 %s1, 4
          %s177 = int_to_ptr.hbm [resolvable:$true] %s176
          %s178 = sshll.u32 [#allocation5], 4
          %s179 = int_to_ptr.vmem [resolvable:$true] %s178
          %181 = dma.hbm_to_vmem [thread:$0]  %s177, 32, %s179, [#allocation6]
        $region16: #{tpu_custom_call.1} parent=11 // pred_fallthru
          _
        // Predicated region
        $region17: #{tpu_custom_call.1} parent=11 // pred_check
          %p182 = pneg %p87
        $region18: #{tpu_custom_call.1} parent=11 // pred_check_branch
          %184 = sbr.rel (%p182) target = $region20
        $region19: #{tpu_custom_call.1} parent=11 // pred_region
          %186 = vsyncadd [#allocation6], 0
          %s188 = sshll.u32 %s2, 4
          %s189 = int_to_ptr.hbm [resolvable:$true] %s188
          %s190 = sshll.u32 [#allocation7], 4
          %s191 = int_to_ptr.vmem [resolvable:$true] %s190
          %193 = dma.hbm_to_vmem [thread:$0]  %s189, 32, %s191, [#allocation6]
        $region20: #{tpu_custom_call.1} parent=11 // pred_fallthru
          _
        // Predicated region
        $region21: #{tpu_custom_call.1} parent=11 // pred_check
          %p194 = pneg %p108
        $region22: #{tpu_custom_call.1} parent=11 // pred_check_branch
          %196 = sbr.rel (%p194) target = $region24
        $region23: #{tpu_custom_call.1} parent=11 // pred_region
          %198 = vsyncadd [#allocation9], 0
          %s199 = sshll.u32 %s3, 4
          %s200 = int_to_ptr.hbm [resolvable:$true] %s199
          %s201 = sshll.u32 [#allocation8], 4
          %s202 = int_to_ptr.vmem [resolvable:$true] %s201
          %207 = dma.hbm_to_vmem [thread:$0]  %s200, 12288, %s202, [#allocation9], 384, 384, 24
        $region24: #{tpu_custom_call.1} parent=11 // pred_fallthru
          _
        // Predicated region
        $region25: #{tpu_custom_call.1} parent=11 // pred_check
          %p208 = pneg %p129
        $region26: #{tpu_custom_call.1} parent=11 // pred_check_branch
          %210 = sbr.rel (%p208) target = $region28
        $region27: #{tpu_custom_call.1} parent=11 // pred_region
          %212 = vsyncadd [#allocation9], 0
          %s214 = sshll.u32 %s4, 4
          %s215 = int_to_ptr.hbm [resolvable:$true] %s214
          %s216 = sshll.u32 [#allocation10], 4
          %s217 = int_to_ptr.vmem [resolvable:$true] %s216
          %219 = dma.hbm_to_vmem [thread:$0]  %s215, 96, %s217, [#allocation9]
        $region28: #{tpu_custom_call.1} parent=11 // pred_fallthru
          _
      $region12: #{tpu_custom_call.1} parent=5 // pred_fallthru
        _
      %p220 = scmp.lt.s32.totalorder %s19, 2
      // Predicated region
      $region29: #{tpu_custom_call.1} parent=5 // pred_check
        %p221 = pneg %p220
      $region30: #{tpu_custom_call.1} parent=5 // pred_check_branch
        %223 = sbr.rel (%p221) target = $region32
      $region31: #{tpu_custom_call.1} parent=5 // pred_region
        // Predicated region
        $region33: #{tpu_custom_call.1} parent=31 // pred_check
          %p224 = pneg %p39
        $region34: #{tpu_custom_call.1} parent=31 // pred_check_branch
          %226 = sbr.rel (%p224) target = $region36
        $region35: #{tpu_custom_call.1} parent=31 // pred_region
          %s227 = sand.u32 %s29, 1
          %s228 = scalar_lea.sflag [#allocation3], %s227
          %s229 = sand.u32 %s29, 1
          %s230 = smul.addr %s229, 8
          %s231 = scalar_lea.vmem [#allocation2], %s230
          %233 = vsyncadd %s228, 0
          %s234 = smul.addr %s19, 2
          %s235 = smul.addr %s234, 4
          %s236 = scalar_lea.hbm %s0, %s235
          %s238 = sshll.u32 %s236, 4
          %s239 = int_to_ptr.hbm [resolvable:$true] %s238
          %s240 = sshll.u32 %s231, 4
          %s241 = int_to_ptr.vmem [resolvable:$true] %s240
          %243 = dma.hbm_to_vmem [thread:$0]  %s239, 128, %s241, %s228
        $region36: #{tpu_custom_call.1} parent=31 // pred_fallthru
          _
      $region32: #{tpu_custom_call.1} parent=5 // pred_fallthru
        _
      %p244 = scmp.le.s32.totalorder 1, %s19
      %p245 = scmp.lt.s32.totalorder %s19, 3
      %p246 = pnand %p244, %p245
      %p247 = pneg %p246
      // Predicated region
      $region37: #{tpu_custom_call.1} parent=5 // pred_check
        _
      $region38: #{tpu_custom_call.1} parent=5 // pred_check_branch
        %249 = sbr.rel (%p246) target = $region40
      $region39: #{tpu_custom_call.1} parent=5 // pred_region
        %s250 = ssub.s32 %s19, 1
        %s251 = sand.u32 %s32, 1
        %s252 = scalar_lea.sflag [#allocation3], %s251
        %s253 = sand.u32 %s32, 1
        %s254 = smul.addr %s253, 8
        %s255 = scalar_lea.vmem [#allocation2], %s254
        // Predicated region
        $region41: #{tpu_custom_call.1} parent=39 // pred_check
          %p256 = pneg %p45
        $region42: #{tpu_custom_call.1} parent=39 // pred_check_branch
          %258 = sbr.rel (%p256) target = $region44
        $region43: #{tpu_custom_call.1} parent=39 // pred_region
          %260 = dma.done %s252, 128
        $region44: #{tpu_custom_call.1} parent=39 // pred_fallthru
          _
        // Predicated region
        $region45: #{tpu_custom_call.1} parent=39 // pred_check
          %p261 = pneg %p66
        $region46: #{tpu_custom_call.1} parent=39 // pred_check_branch
          %263 = sbr.rel (%p261) target = $region48
        $region47: #{tpu_custom_call.1} parent=39 // pred_region
          %265 = dma.done [#allocation6], 32
        $region48: #{tpu_custom_call.1} parent=39 // pred_fallthru
          _
        // Predicated region
        $region49: #{tpu_custom_call.1} parent=39 // pred_check
          %p266 = pneg %p87
        $region50: #{tpu_custom_call.1} parent=39 // pred_check_branch
          %268 = sbr.rel (%p266) target = $region52
        $region51: #{tpu_custom_call.1} parent=39 // pred_region
          %270 = dma.done [#allocation6], 32
        $region52: #{tpu_custom_call.1} parent=39 // pred_fallthru
          _
        // Predicated region
        $region53: #{tpu_custom_call.1} parent=39 // pred_check
          %p271 = pneg %p108
        $region54: #{tpu_custom_call.1} parent=39 // pred_check_branch
          %273 = sbr.rel (%p271) target = $region56
        $region55: #{tpu_custom_call.1} parent=39 // pred_region
          %275 = dma.done [#allocation9], 12288
        $region56: #{tpu_custom_call.1} parent=39 // pred_fallthru
          _
        // Predicated region
        $region57: #{tpu_custom_call.1} parent=39 // pred_check
          %p276 = pneg %p129
        $region58: #{tpu_custom_call.1} parent=39 // pred_check_branch
          %278 = sbr.rel (%p276) target = $region60
        $region59: #{tpu_custom_call.1} parent=39 // pred_region
          %280 = dma.done [#allocation9], 96
        $region60: #{tpu_custom_call.1} parent=39 // pred_fallthru
          _
        %s281 = sand.u32 %s32, 1
        %s282 = scalar_lea.sflag [#allocation3], %s281
        %s283 = sand.u32 %s32, 1
        %s284 = smul.addr %s283, 8
        %s285 = scalar_lea.vmem [#allocation2], %s284
        %p286 = pneg %p45
        %p287 = pneg %p42
        %p288 = pneg %p66
        %p289 = pneg %p63
        %p290 = pneg %p87
        %p291 = pneg %p84
        %p292 = pneg %p108
        %p293 = pneg %p105
        %p294 = pneg %p129
        %p295 = pneg %p126
        %p296 = pneg %p155
        %p297 = pneg %p152
        %s298 = sand.u32 %s142, 1
        %s299 = scalar_lea.sflag [#allocation4], %s298
        %s300 = sand.u32 %s142, 1
        %s301 = smul.addr %s300, 24
        %s302 = scalar_lea.vmem [#allocation11], %s301
        %v303 = vld [vmem:[%s255] sm:$0xff]
        %v304 = vunpack.c.l.bf16 %v303
        %v305 = vunpack.c.h.bf16 %v303
        %v306 = vadd.f32 %v304, %v305
        %307 = vadd.xlane.f32.xlu0 %v306
        %v308 = vpop.xlane.xlu0 %307
        %v309 = vrcp.pop 256.0
        %v310 = vmul.f32 256.0, %v309
        %v311 = vsub.f32 1.0, %v310
        %v312 = vmul.f32 %v309, %v311
        %v313 = vadd.f32 %v309, %v312
        %vm314 = vweird.f32 %v309
        %v315 = vsel %vm314, %v309, %v313
        %v316 = vmul.f32 %v308, %v315
        %v317 = vsub.f32 %v304, %v316
        %v318 = vsub.f32 %v305, %v316
        %v319 = vmul.f32 %v317, %v317
        %v320 = vmul.f32 %v318, %v318
        %v321 = vadd.f32 %v319, %v320
        %322 = vadd.xlane.f32.xlu0 %v321
        %v323 = vpop.xlane.xlu0 %322
        %v324 = vmul.f32 %v323, %v315
        %v325 = vadd.f32 %v324, 1e-05
        %v326 = vrsqrt.pop %v325
        %v327 = vmul.f32 %v326, %v325
        %v328 = vmul.f32 %v327, %v326
        %v329 = vmul.f32 0.5, %v328
        %v330 = vsub.f32 1.5, %v329
        %v331 = vmul.f32 %v326, %v330
        %vm332 = vweird.f32 %v325
        %vm333 = vweird.f32 %v326
        %vm334 = vmor %vm332, %vm333
        %v335 = vsel %vm334, %v326, %v331
        %v336 = vmul.f32 %v317, %v335
        %v337 = vmul.f32 %v318, %v335
        %v338 = vld [vmem:[#allocation5] sm:$0x3]
        %v339 = vunpack.c.l.bf16 %v338
        %v341 = vperm.slane %v339, 0
        %v342 = vperm.slane %v339, 2
        %v345 = vperm.slane %v341, 0
        %v346 = vperm.slane %v342, 0
        %v347 = vmul.f32 %v336, %v345
        %v348 = vmul.f32 %v337, %v346
        %v349 = vld [vmem:[#allocation7] sm:$0x3]
        %v350 = vunpack.c.l.bf16 %v349
        %v352 = vperm.slane %v350, 0
        %v353 = vperm.slane %v350, 2
        %v356 = vperm.slane %v352, 0
        %v357 = vperm.slane %v353, 0
        %v358 = vadd.f32 %v347, %v356
        %v359 = vadd.f32 %v348, %v357
        %v360 = vpack.c.bf16 %v358, %v358
        %v361 = vpack.c.bf16 %v359, %v359
        %v362 = vld [vmem:[#allocation8] sm:$0xff]
        %v363 = vld [vmem:[#allocation8 + $0x8] sm:$0xff]
        %v364 = vld [vmem:[#allocation8 + $0x10] sm:$0xff]
        %v365 = vld [vmem:[#allocation8 + $0x18] sm:$0xff]
        %v366 = vld [vmem:[#allocation8 + $0x20] sm:$0xff]
        %v367 = vld [vmem:[#allocation8 + $0x28] sm:$0xff]
        %v368 = vld [vmem:[#allocation8 + $0x30] sm:$0xff]
        %v369 = vld [vmem:[#allocation8 + $0x38] sm:$0xff]
        %v370 = vld [vmem:[#allocation8 + $0x40] sm:$0xff]
        %v371 = vld [vmem:[#allocation8 + $0x48] sm:$0xff]
        %v372 = vld [vmem:[#allocation8 + $0x50] sm:$0xff]
        %v373 = vld [vmem:[#allocation8 + $0x58] sm:$0xff]
        %v374 = vld [vmem:[#allocation8 + $0x60] sm:$0xff]
        %v375 = vld [vmem:[#allocation8 + $0x68] sm:$0xff]
        %v376 = vld [vmem:[#allocation8 + $0x70] sm:$0xff]
        %v377 = vld [vmem:[#allocation8 + $0x78] sm:$0xff]
        %v378 = vld [vmem:[#allocation8 + $0x80] sm:$0xff]
        %v379 = vld [vmem:[#allocation8 + $0x88] sm:$0xff]
        %v380 = vld [vmem:[#allocation8 + $0x90] sm:$0xff]
        %v381 = vld [vmem:[#allocation8 + $0x98] sm:$0xff]
        %v382 = vld [vmem:[#allocation8 + $0xa0] sm:$0xff]
        %v383 = vld [vmem:[#allocation8 + $0xa8] sm:$0xff]
        %v384 = vld [vmem:[#allocation8 + $0xb0] sm:$0xff]
        %v385 = vld [vmem:[#allocation8 + $0xb8] sm:$0xff]
        %v386 = vld [vmem:[#allocation8 + $0xc0] sm:$0xff]
        %v387 = vld [vmem:[#allocation8 + $0xc8] sm:$0xff]
        %v388 = vld [vmem:[#allocation8 + $0xd0] sm:$0xff]
        %v389 = vld [vmem:[#allocation8 + $0xd8] sm:$0xff]
        %v390 = vld [vmem:[#allocation8 + $0xe0] sm:$0xff]
        %v391 = vld [vmem:[#allocation8 + $0xe8] sm:$0xff]
        %v392 = vld [vmem:[#allocation8 + $0xf0] sm:$0xff]
        %v393 = vld [vmem:[#allocation8 + $0xf8] sm:$0xff]
        %v394 = vld [vmem:[#allocation8 + $0x100] sm:$0xff]
        %v395 = vld [vmem:[#allocation8 + $0x108] sm:$0xff]
        %v396 = vld [vmem:[#allocation8 + $0x110] sm:$0xff]
        %v397 = vld [vmem:[#allocation8 + $0x118] sm:$0xff]
        %v398 = vld [vmem:[#allocation8 + $0x120] sm:$0xff]
        %v399 = vld [vmem:[#allocation8 + $0x128] sm:$0xff]
        %v400 = vld [vmem:[#allocation8 + $0x130] sm:$0xff]
        %v401 = vld [vmem:[#allocation8 + $0x138] sm:$0xff]
        %v402 = vld [vmem:[#allocation8 + $0x140] sm:$0xff]
        %v403 = vld [vmem:[#allocation8 + $0x148] sm:$0xff]
        %v404 = vld [vmem:[#allocation8 + $0x150] sm:$0xff]
        %v405 = vld [vmem:[#allocation8 + $0x158] sm:$0xff]
        %v406 = vld [vmem:[#allocation8 + $0x160] sm:$0xff]
        %v407 = vld [vmem:[#allocation8 + $0x168] sm:$0xff]
        %v408 = vld [vmem:[#allocation8 + $0x170] sm:$0xff]
        %v409 = vld [vmem:[#allocation8 + $0x178] sm:$0xff]
        %v410 = vld [vmem:[#allocation8 + $0x180] sm:$0xff]
        %v411 = vld [vmem:[#allocation8 + $0x188] sm:$0xff]
        %v412 = vld [vmem:[#allocation8 + $0x190] sm:$0xff]
        %v413 = vld [vmem:[#allocation8 + $0x198] sm:$0xff]
        %v414 = vld [vmem:[#allocation8 + $0x1a0] sm:$0xff]
        %v415 = vld [vmem:[#allocation8 + $0x1a8] sm:$0xff]
        %v416 = vld [vmem:[#allocation8 + $0x1b0] sm:$0xff]
        %v417 = vld [vmem:[#allocation8 + $0x1b8] sm:$0xff]
        %v418 = vld [vmem:[#allocation8 + $0x1c0] sm:$0xff]
        %v419 = vld [vmem:[#allocation8 + $0x1c8] sm:$0xff]
        %v420 = vld [vmem:[#allocation8 + $0x1d0] sm:$0xff]
        %v421 = vld [vmem:[#allocation8 + $0x1d8] sm:$0xff]
        %v422 = vld [vmem:[#allocation8 + $0x1e0] sm:$0xff]
        %v423 = vld [vmem:[#allocation8 + $0x1e8] sm:$0xff]
        %v424 = vld [vmem:[#allocation8 + $0x1f0] sm:$0xff]
        %v425 = vld [vmem:[#allocation8 + $0x1f8] sm:$0xff]
        %v426 = vld [vmem:[#allocation8 + $0x200] sm:$0xff]
        %v427 = vld [vmem:[#allocation8 + $0x208] sm:$0xff]
        %v428 = vld [vmem:[#allocation8 + $0x210] sm:$0xff]
        %v429 = vld [vmem:[#allocation8 + $0x218] sm:$0xff]
        %v430 = vld [vmem:[#allocation8 + $0x220] sm:$0xff]
        %v431 = vld [vmem:[#allocation8 + $0x228] sm:$0xff]
        %v432 = vld [vmem:[#allocation8 + $0x230] sm:$0xff]
        %v433 = vld [vmem:[#allocation8 + $0x238] sm:$0xff]
        %v434 = vld [vmem:[#allocation8 + $0x240] sm:$0xff]
        %v435 = vld [vmem:[#allocation8 + $0x248] sm:$0xff]
        %v436 = vld [vmem:[#allocation8 + $0x250] sm:$0xff]
        %v437 = vld [vmem:[#allocation8 + $0x258] sm:$0xff]
        %v438 = vld [vmem:[#allocation8 + $0x260] sm:$0xff]
        %v439 = vld [vmem:[#allocation8 + $0x268] sm:$0xff]
        %v440 = vld [vmem:[#allocation8 + $0x270] sm:$0xff]
        %v441 = vld [vmem:[#allocation8 + $0x278] sm:$0xff]
        %v442 = vld [vmem:[#allocation8 + $0x280] sm:$0xff]
        %v443 = vld [vmem:[#allocation8 + $0x288] sm:$0xff]
        %v444 = vld [vmem:[#allocation8 + $0x290] sm:$0xff]
        %v445 = vld [vmem:[#allocation8 + $0x298] sm:$0xff]
        %v446 = vld [vmem:[#allocation8 + $0x2a0] sm:$0xff]
        %v447 = vld [vmem:[#allocation8 + $0x2a8] sm:$0xff]
        %v448 = vld [vmem:[#allocation8 + $0x2b0] sm:$0xff]
        %v449 = vld [vmem:[#allocation8 + $0x2b8] sm:$0xff]
        %v450 = vld [vmem:[#allocation8 + $0x2c0] sm:$0xff]
        %v451 = vld [vmem:[#allocation8 + $0x2c8] sm:$0xff]
        %v452 = vld [vmem:[#allocation8 + $0x2d0] sm:$0xff]
        %v453 = vld [vmem:[#allocation8 + $0x2d8] sm:$0xff]
        %v454 = vld [vmem:[#allocation8 + $0x2e0] sm:$0xff]
        %v455 = vld [vmem:[#allocation8 + $0x2e8] sm:$0xff]
        %v456 = vld [vmem:[#allocation8 + $0x2f0] sm:$0xff]
        %v457 = vld [vmem:[#allocation8 + $0x2f8] sm:$0xff]
        %v458 = vld [vmem:[#allocation10] sm:$0x3f]
        %v459 = vunpack.c.l.bf16 %v458
        %v460 = vunpack.c.h.bf16 %v458
        %v463 = vperm.slane %v459, 0
        %v464 = vperm.slane %v459, 2
        %v465 = vperm.slane %v459, 4
        %v466 = vperm.slane %v459, 6
        %v467 = vperm.slane %v460, 0
        %v468 = vperm.slane %v460, 2
        %v475 = vperm.slane %v463, 0
        %v476 = vperm.slane %v464, 0
        %v477 = vperm.slane %v465, 0
        %v478 = vperm.slane %v466, 0
        %v479 = vperm.slane %v467, 0
        %v480 = vperm.slane %v468, 0
        %v577 = vunpack.c.l.b16 %v362
        %v578 = vunpack.c.h.b16 %v362
        %v579 = vunpack.c.l.b16 %v363
        %v580 = vunpack.c.h.b16 %v363
        %v581 = vunpack.c.l.b16 %v364
        %v582 = vunpack.c.h.b16 %v364
        %v583 = vunpack.c.l.b16 %v365
        %v584 = vunpack.c.h.b16 %v365
        %v585 = vunpack.c.l.b16 %v366
        %v586 = vunpack.c.h.b16 %v366
        %v587 = vunpack.c.l.b16 %v367
        %v588 = vunpack.c.h.b16 %v367
        %v589 = vunpack.c.l.b16 %v368
        %v590 = vunpack.c.h.b16 %v368
        %v591 = vunpack.c.l.b16 %v369
        %v592 = vunpack.c.h.b16 %v369
        %v593 = vunpack.c.l.b16 %v370
        %v594 = vunpack.c.h.b16 %v370
        %v595 = vunpack.c.l.b16 %v371
        %v596 = vunpack.c.h.b16 %v371
        %v597 = vunpack.c.l.b16 %v372
        %v598 = vunpack.c.h.b16 %v372
        %v599 = vunpack.c.l.b16 %v373
        %v600 = vunpack.c.h.b16 %v373
        %v601 = vunpack.c.l.b16 %v374
        %v602 = vunpack.c.h.b16 %v374
        %v603 = vunpack.c.l.b16 %v375
        %v604 = vunpack.c.h.b16 %v375
        %v605 = vunpack.c.l.b16 %v376
        %v606 = vunpack.c.h.b16 %v376
        %v607 = vunpack.c.l.b16 %v377
        %v608 = vunpack.c.h.b16 %v377
        %v609 = vunpack.c.l.b16 %v378
        %v610 = vunpack.c.h.b16 %v378
        %v611 = vunpack.c.l.b16 %v379
        %v612 = vunpack.c.h.b16 %v379
        %v613 = vunpack.c.l.b16 %v380
        %v614 = vunpack.c.h.b16 %v380
        %v615 = vunpack.c.l.b16 %v381
        %v616 = vunpack.c.h.b16 %v381
        %v617 = vunpack.c.l.b16 %v382
        %v618 = vunpack.c.h.b16 %v382
        %v619 = vunpack.c.l.b16 %v383
        %v620 = vunpack.c.h.b16 %v383
        %v621 = vunpack.c.l.b16 %v384
        %v622 = vunpack.c.h.b16 %v384
        %v623 = vunpack.c.l.b16 %v385
        %v624 = vunpack.c.h.b16 %v385
        %v625 = vunpack.c.l.b16 %v386
        %v626 = vunpack.c.h.b16 %v386
        %v627 = vunpack.c.l.b16 %v387
        %v628 = vunpack.c.h.b16 %v387
        %v629 = vunpack.c.l.b16 %v388
        %v630 = vunpack.c.h.b16 %v388
        %v631 = vunpack.c.l.b16 %v389
        %v632 = vunpack.c.h.b16 %v389
        %v633 = vunpack.c.l.b16 %v390
        %v634 = vunpack.c.h.b16 %v390
        %v635 = vunpack.c.l.b16 %v391
        %v636 = vunpack.c.h.b16 %v391
        %v637 = vunpack.c.l.b16 %v392
        %v638 = vunpack.c.h.b16 %v392
        %v639 = vunpack.c.l.b16 %v393
        %v640 = vunpack.c.h.b16 %v393
        %v641 = vunpack.c.l.b16 %v394
        %v642 = vunpack.c.h.b16 %v394
        %v643 = vunpack.c.l.b16 %v395
        %v644 = vunpack.c.h.b16 %v395
        %v645 = vunpack.c.l.b16 %v396
        %v646 = vunpack.c.h.b16 %v396
        %v647 = vunpack.c.l.b16 %v397
        %v648 = vunpack.c.h.b16 %v397
        %v649 = vunpack.c.l.b16 %v398
        %v650 = vunpack.c.h.b16 %v398
        %v651 = vunpack.c.l.b16 %v399
        %v652 = vunpack.c.h.b16 %v399
        %v653 = vunpack.c.l.b16 %v400
        %v654 = vunpack.c.h.b16 %v400
        %v655 = vunpack.c.l.b16 %v401
        %v656 = vunpack.c.h.b16 %v401
        %v657 = vunpack.c.l.b16 %v402
        %v658 = vunpack.c.h.b16 %v402
        %v659 = vunpack.c.l.b16 %v403
        %v660 = vunpack.c.h.b16 %v403
        %v661 = vunpack.c.l.b16 %v404
        %v662 = vunpack.c.h.b16 %v404
        %v663 = vunpack.c.l.b16 %v405
        %v664 = vunpack.c.h.b16 %v405
        %v665 = vunpack.c.l.b16 %v406
        %v666 = vunpack.c.h.b16 %v406
        %v667 = vunpack.c.l.b16 %v407
        %v668 = vunpack.c.h.b16 %v407
        %v669 = vunpack.c.l.b16 %v408
        %v670 = vunpack.c.h.b16 %v408
        %v671 = vunpack.c.l.b16 %v409
        %v672 = vunpack.c.h.b16 %v409
        %v673 = vunpack.c.l.b16 %v410
        %v674 = vunpack.c.h.b16 %v410
        %v675 = vunpack.c.l.b16 %v411
        %v676 = vunpack.c.h.b16 %v411
        %v677 = vunpack.c.l.b16 %v412
        %v678 = vunpack.c.h.b16 %v412
        %v679 = vunpack.c.l.b16 %v413
        %v680 = vunpack.c.h.b16 %v413
        %v681 = vunpack.c.l.b16 %v414
        %v682 = vunpack.c.h.b16 %v414
        %v683 = vunpack.c.l.b16 %v415
        %v684 = vunpack.c.h.b16 %v415
        %v685 = vunpack.c.l.b16 %v416
        %v686 = vunpack.c.h.b16 %v416
        %v687 = vunpack.c.l.b16 %v417
        %v688 = vunpack.c.h.b16 %v417
        %v689 = vunpack.c.l.b16 %v418
        %v690 = vunpack.c.h.b16 %v418
        %v691 = vunpack.c.l.b16 %v419
        %v692 = vunpack.c.h.b16 %v419
        %v693 = vunpack.c.l.b16 %v420
        %v694 = vunpack.c.h.b16 %v420
        %v695 = vunpack.c.l.b16 %v421
        %v696 = vunpack.c.h.b16 %v421
        %v697 = vunpack.c.l.b16 %v422
        %v698 = vunpack.c.h.b16 %v422
        %v699 = vunpack.c.l.b16 %v423
        %v700 = vunpack.c.h.b16 %v423
        %v701 = vunpack.c.l.b16 %v424
        %v702 = vunpack.c.h.b16 %v424
        %v703 = vunpack.c.l.b16 %v425
        %v704 = vunpack.c.h.b16 %v425
        %v705 = vunpack.c.l.b16 %v426
        %v706 = vunpack.c.h.b16 %v426
        %v707 = vunpack.c.l.b16 %v427
        %v708 = vunpack.c.h.b16 %v427
        %v709 = vunpack.c.l.b16 %v428
        %v710 = vunpack.c.h.b16 %v428
        %v711 = vunpack.c.l.b16 %v429
        %v712 = vunpack.c.h.b16 %v429
        %v713 = vunpack.c.l.b16 %v430
        %v714 = vunpack.c.h.b16 %v430
        %v715 = vunpack.c.l.b16 %v431
        %v716 = vunpack.c.h.b16 %v431
        %v717 = vunpack.c.l.b16 %v432
        %v718 = vunpack.c.h.b16 %v432
        %v719 = vunpack.c.l.b16 %v433
        %v720 = vunpack.c.h.b16 %v433
        %v721 = vunpack.c.l.b16 %v434
        %v722 = vunpack.c.h.b16 %v434
        %v723 = vunpack.c.l.b16 %v435
        %v724 = vunpack.c.h.b16 %v435
        %v725 = vunpack.c.l.b16 %v436
        %v726 = vunpack.c.h.b16 %v436
        %v727 = vunpack.c.l.b16 %v437
        %v728 = vunpack.c.h.b16 %v437
        %v729 = vunpack.c.l.b16 %v438
        %v730 = vunpack.c.h.b16 %v438
        %v731 = vunpack.c.l.b16 %v439
        %v732 = vunpack.c.h.b16 %v439
        %v733 = vunpack.c.l.b16 %v440
        %v734 = vunpack.c.h.b16 %v440
        %v735 = vunpack.c.l.b16 %v441
        %v736 = vunpack.c.h.b16 %v441
        %v737 = vunpack.c.l.b16 %v442
        %v738 = vunpack.c.h.b16 %v442
        %v739 = vunpack.c.l.b16 %v443
        %v740 = vunpack.c.h.b16 %v443
        %v741 = vunpack.c.l.b16 %v444
        %v742 = vunpack.c.h.b16 %v444
        %v743 = vunpack.c.l.b16 %v445
        %v744 = vunpack.c.h.b16 %v445
        %v745 = vunpack.c.l.b16 %v446
        %v746 = vunpack.c.h.b16 %v446
        %v747 = vunpack.c.l.b16 %v447
        %v748 = vunpack.c.h.b16 %v447
        %v749 = vunpack.c.l.b16 %v448
        %v750 = vunpack.c.h.b16 %v448
        %v751 = vunpack.c.l.b16 %v449
        %v752 = vunpack.c.h.b16 %v449
        %v753 = vunpack.c.l.b16 %v450
        %v754 = vunpack.c.h.b16 %v450
        %v755 = vunpack.c.l.b16 %v451
        %v756 = vunpack.c.h.b16 %v451
        %v757 = vunpack.c.l.b16 %v452
        %v758 = vunpack.c.h.b16 %v452
        %v759 = vunpack.c.l.b16 %v453
        %v760 = vunpack.c.h.b16 %v453
        %v761 = vunpack.c.l.b16 %v454
        %v762 = vunpack.c.h.b16 %v454
        %v763 = vunpack.c.l.b16 %v455
        %v764 = vunpack.c.h.b16 %v455
        %v765 = vunpack.c.l.b16 %v456
        %v766 = vunpack.c.h.b16 %v456
        %v767 = vunpack.c.l.b16 %v457
        %v768 = vunpack.c.h.b16 %v457
        %v769 = vpack.c.b16 %v583, %v577
        %v770 = vpack.c.b16 %v584, %v578
        %v771 = vpack.c.b16 %v585, %v579
        %v772 = vpack.c.b16 %v586, %v580
        %v773 = vpack.c.b16 %v587, %v581
        %v774 = vpack.c.b16 %v588, %v582
        %v775 = vpack.c.b16 %v595, %v589
        %v776 = vpack.c.b16 %v596, %v590
        %v777 = vpack.c.b16 %v597, %v591
        %v778 = vpack.c.b16 %v598, %v592
        %v779 = vpack.c.b16 %v599, %v593
        %v780 = vpack.c.b16 %v600, %v594
        %v781 = vpack.c.b16 %v607, %v601
        %v782 = vpack.c.b16 %v608, %v602
        %v783 = vpack.c.b16 %v609, %v603
        %v784 = vpack.c.b16 %v610, %v604
        %v785 = vpack.c.b16 %v611, %v605
        %v786 = vpack.c.b16 %v612, %v606
        %v787 = vpack.c.b16 %v619, %v613
        %v788 = vpack.c.b16 %v620, %v614
        %v789 = vpack.c.b16 %v621, %v615
        %v790 = vpack.c.b16 %v622, %v616
        %v791 = vpack.c.b16 %v623, %v617
        %v792 = vpack.c.b16 %v624, %v618
        %v793 = vpack.c.b16 %v631, %v625
        %v794 = vpack.c.b16 %v632, %v626
        %v795 = vpack.c.b16 %v633, %v627
        %v796 = vpack.c.b16 %v634, %v628
        %v797 = vpack.c.b16 %v635, %v629
        %v798 = vpack.c.b16 %v636, %v630
        %v799 = vpack.c.b16 %v643, %v637
        %v800 = vpack.c.b16 %v644, %v638
        %v801 = vpack.c.b16 %v645, %v639
        %v802 = vpack.c.b16 %v646, %v640
        %v803 = vpack.c.b16 %v647, %v641
        %v804 = vpack.c.b16 %v648, %v642
        %v805 = vpack.c.b16 %v655, %v649
        %v806 = vpack.c.b16 %v656, %v650
        %v807 = vpack.c.b16 %v657, %v651
        %v808 = vpack.c.b16 %v658, %v652
        %v809 = vpack.c.b16 %v659, %v653
        %v810 = vpack.c.b16 %v660, %v654
        %v811 = vpack.c.b16 %v667, %v661
        %v812 = vpack.c.b16 %v668, %v662
        %v813 = vpack.c.b16 %v669, %v663
        %v814 = vpack.c.b16 %v670, %v664
        %v815 = vpack.c.b16 %v671, %v665
        %v816 = vpack.c.b16 %v672, %v666
        %v817 = vpack.c.b16 %v679, %v673
        %v818 = vpack.c.b16 %v680, %v674
        %v819 = vpack.c.b16 %v681, %v675
        %v820 = vpack.c.b16 %v682, %v676
        %v821 = vpack.c.b16 %v683, %v677
        %v822 = vpack.c.b16 %v684, %v678
        %v823 = vpack.c.b16 %v691, %v685
        %v824 = vpack.c.b16 %v692, %v686
        %v825 = vpack.c.b16 %v693, %v687
        %v826 = vpack.c.b16 %v694, %v688
        %v827 = vpack.c.b16 %v695, %v689
        %v828 = vpack.c.b16 %v696, %v690
        %v829 = vpack.c.b16 %v703, %v697
        %v830 = vpack.c.b16 %v704, %v698
        %v831 = vpack.c.b16 %v705, %v699
        %v832 = vpack.c.b16 %v706, %v700
        %v833 = vpack.c.b16 %v707, %v701
        %v834 = vpack.c.b16 %v708, %v702
        %v835 = vpack.c.b16 %v715, %v709
        %v836 = vpack.c.b16 %v716, %v710
        %v837 = vpack.c.b16 %v717, %v711
        %v838 = vpack.c.b16 %v718, %v712
        %v839 = vpack.c.b16 %v719, %v713
        %v840 = vpack.c.b16 %v720, %v714
        %v841 = vpack.c.b16 %v727, %v721
        %v842 = vpack.c.b16 %v728, %v722
        %v843 = vpack.c.b16 %v729, %v723
        %v844 = vpack.c.b16 %v730, %v724
        %v845 = vpack.c.b16 %v731, %v725
        %v846 = vpack.c.b16 %v732, %v726
        %v847 = vpack.c.b16 %v739, %v733
        %v848 = vpack.c.b16 %v740, %v734
        %v849 = vpack.c.b16 %v741, %v735
        %v850 = vpack.c.b16 %v742, %v736
        %v851 = vpack.c.b16 %v743, %v737
        %v852 = vpack.c.b16 %v744, %v738
        %v853 = vpack.c.b16 %v751, %v745
        %v854 = vpack.c.b16 %v752, %v746
        %v855 = vpack.c.b16 %v753, %v747
        %v856 = vpack.c.b16 %v754, %v748
        %v857 = vpack.c.b16 %v755, %v749
        %v858 = vpack.c.b16 %v756, %v750
        %v859 = vpack.c.b16 %v763, %v757
        %v860 = vpack.c.b16 %v764, %v758
        %v861 = vpack.c.b16 %v765, %v759
        %v862 = vpack.c.b16 %v766, %v760
        %v863 = vpack.c.b16 %v767, %v761
        %v864 = vpack.c.b16 %v768, %v762
        %961 = vmatpush.bf16.msra.mxu0 %v811
        %962 = vmatpush.bf16.msra.mxu0 %v805
        %963 = vmatpush.bf16.msra.mxu0 %v799
        %964 = vmatpush.bf16.msra.mxu0 %v793
        %965 = vmatpush.bf16.msra.mxu0 %v787
        %966 = vmatpush.bf16.msra.mxu0 %v781
        %967 = vmatpush.bf16.msra.mxu0 %v775
        %968 = vmatpush.bf16.msra.mxu0 %v769
        %969 = vmatmul.bf16.gmra.mxu0 %v360
        %v970 = vpop.f32.mrf.mxu0
        %v971 = vadd.f32 %v475, %v970
        %v972 = vpop.f32.mrf.mxu0
        %973 = vdwg.mxu0
        %974 = vmatpush.bf16.msra.mxu0 %v859
        %975 = vmatpush.bf16.msra.mxu0 %v853
        %976 = vmatpush.bf16.msra.mxu0 %v847
        %977 = vmatpush.bf16.msra.mxu0 %v841
        %978 = vmatpush.bf16.msra.mxu0 %v835
        %979 = vmatpush.bf16.msra.mxu0 %v829
        %980 = vmatpush.bf16.msra.mxu0 %v823
        %981 = vmatpush.bf16.msra.mxu0 %v817
        %982 = vmatmul.bf16.gmra.mxu0 %v361
        %v983 = vpop.f32.mrf.mxu0
        %v984 = vadd.f32 %v971, %v983
        %v985 = vpop.f32.mrf.mxu0
        %986 = vdwg.mxu0
        %987 = vmatpush.bf16.msra.mxu0 %v812
        %988 = vmatpush.bf16.msra.mxu0 %v806
        %989 = vmatpush.bf16.msra.mxu0 %v800
        %990 = vmatpush.bf16.msra.mxu0 %v794
        %991 = vmatpush.bf16.msra.mxu0 %v788
        %992 = vmatpush.bf16.msra.mxu0 %v782
        %993 = vmatpush.bf16.msra.mxu0 %v776
        %994 = vmatpush.bf16.msra.mxu0 %v770
        %995 = vmatmul.bf16.gmra.mxu0 %v360
        %v996 = vpop.f32.mrf.mxu0
        %v997 = vadd.f32 %v476, %v996
        %v998 = vpop.f32.mrf.mxu0
        %999 = vdwg.mxu0
        %1000 = vmatpush.bf16.msra.mxu0 %v860
        %1001 = vmatpush.bf16.msra.mxu0 %v854
        %1002 = vmatpush.bf16.msra.mxu0 %v848
        %1003 = vmatpush.bf16.msra.mxu0 %v842
        %1004 = vmatpush.bf16.msra.mxu0 %v836
        %1005 = vmatpush.bf16.msra.mxu0 %v830
        %1006 = vmatpush.bf16.msra.mxu0 %v824
        %1007 = vmatpush.bf16.msra.mxu0 %v818
        %1008 = vmatmul.bf16.gmra.mxu0 %v361
        %v1009 = vpop.f32.mrf.mxu0
        %v1010 = vadd.f32 %v997, %v1009
        %v1011 = vpop.f32.mrf.mxu0
        %1012 = vdwg.mxu0
        %1013 = vmatpush.bf16.msra.mxu0 %v813
        %1014 = vmatpush.bf16.msra.mxu0 %v807
        %1015 = vmatpush.bf16.msra.mxu0 %v801
        %1016 = vmatpush.bf16.msra.mxu0 %v795
        %1017 = vmatpush.bf16.msra.mxu0 %v789
        %1018 = vmatpush.bf16.msra.mxu0 %v783
        %1019 = vmatpush.bf16.msra.mxu0 %v777
        %1020 = vmatpush.bf16.msra.mxu0 %v771
        %1021 = vmatmul.bf16.gmra.mxu0 %v360
        %v1022 = vpop.f32.mrf.mxu0
        %v1023 = vadd.f32 %v477, %v1022
        %v1024 = vpop.f32.mrf.mxu0
        %1025 = vdwg.mxu0
        %1026 = vmatpush.bf16.msra.mxu0 %v861
        %1027 = vmatpush.bf16.msra.mxu0 %v855
        %1028 = vmatpush.bf16.msra.mxu0 %v849
        %1029 = vmatpush.bf16.msra.mxu0 %v843
        %1030 = vmatpush.bf16.msra.mxu0 %v837
        %1031 = vmatpush.bf16.msra.mxu0 %v831
        %1032 = vmatpush.bf16.msra.mxu0 %v825
        %1033 = vmatpush.bf16.msra.mxu0 %v819
        %1034 = vmatmul.bf16.gmra.mxu0 %v361
        %v1035 = vpop.f32.mrf.mxu0
        %v1036 = vadd.f32 %v1023, %v1035
        %v1037 = vpop.f32.mrf.mxu0
        %1038 = vdwg.mxu0
        %1039 = vmatpush.bf16.msra.mxu0 %v814
        %1040 = vmatpush.bf16.msra.mxu0 %v808
        %1041 = vmatpush.bf16.msra.mxu0 %v802
        %1042 = vmatpush.bf16.msra.mxu0 %v796
        %1043 = vmatpush.bf16.msra.mxu0 %v790
        %1044 = vmatpush.bf16.msra.mxu0 %v784
        %1045 = vmatpush.bf16.msra.mxu0 %v778
        %1046 = vmatpush.bf16.msra.mxu0 %v772
        %1047 = vmatmul.bf16.gmra.mxu0 %v360
        %v1048 = vpop.f32.mrf.mxu0
        %v1049 = vadd.f32 %v478, %v1048
        %v1050 = vpop.f32.mrf.mxu0
        %1051 = vdwg.mxu0
        %1052 = vmatpush.bf16.msra.mxu0 %v862
        %1053 = vmatpush.bf16.msra.mxu0 %v856
        %1054 = vmatpush.bf16.msra.mxu0 %v850
        %1055 = vmatpush.bf16.msra.mxu0 %v844
        %1056 = vmatpush.bf16.msra.mxu0 %v838
        %1057 = vmatpush.bf16.msra.mxu0 %v832
        %1058 = vmatpush.bf16.msra.mxu0 %v826
        %1059 = vmatpush.bf16.msra.mxu0 %v820
        %1060 = vmatmul.bf16.gmra.mxu0 %v361
        %v1061 = vpop.f32.mrf.mxu0
        %v1062 = vadd.f32 %v1049, %v1061
        %v1063 = vpop.f32.mrf.mxu0
        %1064 = vdwg.mxu0
        %1065 = vmatpush.bf16.msra.mxu0 %v815
        %1066 = vmatpush.bf16.msra.mxu0 %v809
        %1067 = vmatpush.bf16.msra.mxu0 %v803
        %1068 = vmatpush.bf16.msra.mxu0 %v797
        %1069 = vmatpush.bf16.msra.mxu0 %v791
        %1070 = vmatpush.bf16.msra.mxu0 %v785
        %1071 = vmatpush.bf16.msra.mxu0 %v779
        %1072 = vmatpush.bf16.msra.mxu0 %v773
        %1073 = vmatmul.bf16.gmra.mxu0 %v360
        %v1074 = vpop.f32.mrf.mxu0
        %v1075 = vadd.f32 %v479, %v1074
        %v1076 = vpop.f32.mrf.mxu0
        %1077 = vdwg.mxu0
        %1078 = vmatpush.bf16.msra.mxu0 %v863
        %1079 = vmatpush.bf16.msra.mxu0 %v857
        %1080 = vmatpush.bf16.msra.mxu0 %v851
        %1081 = vmatpush.bf16.msra.mxu0 %v845
        %1082 = vmatpush.bf16.msra.mxu0 %v839
        %1083 = vmatpush.bf16.msra.mxu0 %v833
        %1084 = vmatpush.bf16.msra.mxu0 %v827
        %1085 = vmatpush.bf16.msra.mxu0 %v821
        %1086 = vmatmul.bf16.gmra.mxu0 %v361
        %v1087 = vpop.f32.mrf.mxu0
        %v1088 = vadd.f32 %v1075, %v1087
        %v1089 = vpop.f32.mrf.mxu0
        %1090 = vdwg.mxu0
        %1091 = vmatpush.bf16.msra.mxu0 %v816
        %1092 = vmatpush.bf16.msra.mxu0 %v810
        %1093 = vmatpush.bf16.msra.mxu0 %v804
        %1094 = vmatpush.bf16.msra.mxu0 %v798
        %1095 = vmatpush.bf16.msra.mxu0 %v792
        %1096 = vmatpush.bf16.msra.mxu0 %v786
        %1097 = vmatpush.bf16.msra.mxu0 %v780
        %1098 = vmatpush.bf16.msra.mxu0 %v774
        %1099 = vmatmul.bf16.gmra.mxu0 %v360
        %v1100 = vpop.f32.mrf.mxu0
        %v1101 = vadd.f32 %v480, %v1100
        %v1102 = vpop.f32.mrf.mxu0
        %1103 = vdwg.mxu0
        %1104 = vmatpush.bf16.msra.mxu0 %v864
        %1105 = vmatpush.bf16.msra.mxu0 %v858
        %1106 = vmatpush.bf16.msra.mxu0 %v852
        %1107 = vmatpush.bf16.msra.mxu0 %v846
        %1108 = vmatpush.bf16.msra.mxu0 %v840
        %1109 = vmatpush.bf16.msra.mxu0 %v834
        %1110 = vmatpush.bf16.msra.mxu0 %v828
        %1111 = vmatpush.bf16.msra.mxu0 %v822
        %1112 = vmatmul.bf16.gmra.mxu0 %v361
        %v1113 = vpop.f32.mrf.mxu0
        %v1114 = vadd.f32 %v1101, %v1113
        %v1115 = vpop.f32.mrf.mxu0
        %1116 = vdwg.mxu0
        %v1117 = vpack.c.bf16 %v1010, %v984
        %v1118 = vpack.c.bf16 %v1062, %v1036
        %v1119 = vpack.c.bf16 %v1114, %v1088
        %1120 = vst [vmem:[%s302] sm:$0xff] %v1117
        %1121 = vst [vmem:[%s302 + $0x8] sm:$0xff] %v1118
        %1122 = vst [vmem:[%s302 + $0x10] sm:$0xff] %v1119
        %s1123 = sand.u32 %s142, 1
        %s1124 = scalar_lea.sflag [#allocation4], %s1123
        %s1125 = sand.u32 %s142, 1
        %s1126 = smul.addr %s1125, 24
        %s1127 = scalar_lea.vmem [#allocation11], %s1126
        // Predicated region
        $region61: #{tpu_custom_call.1} parent=39 // pred_check
          %p1128 = pneg %p152
        $region62: #{tpu_custom_call.1} parent=39 // pred_check_branch
          %1130 = sbr.rel (%p1128) target = $region64
        $region63: #{tpu_custom_call.1} parent=39 // pred_region
          %1132 = vsyncadd %s1124, 0
          %s1133 = smul.addr %s24, 6
          %s1134 = smul.addr %s1133, 4
          %s1135 = scalar_lea.hbm %s5, %s1134
          %s1137 = sshll.u32 %s1127, 4
          %s1138 = int_to_ptr.vmem [resolvable:$true] %s1137
          %s1139 = sshll.u32 %s1135, 4
          %s1140 = int_to_ptr.hbm [resolvable:$true] %s1139
          %1142 = dma.vmem_to_hbm [thread:$0]  %s1138, 384, %s1140, %s1124
        $region64: #{tpu_custom_call.1} parent=39 // pred_fallthru
          _
      $region40: #{tpu_custom_call.1} parent=5 // pred_fallthru
        _
      %p1143 = scmp.le.s32.totalorder 2, %s19
      // Predicated region
      $region65: #{tpu_custom_call.1} parent=5 // pred_check
        %p1144 = pneg %p1143
      $region66: #{tpu_custom_call.1} parent=5 // pred_check_branch
        %1146 = sbr.rel (%p1144) target = $region68
      $region67: #{tpu_custom_call.1} parent=5 // pred_region
        %s1147 = ssub.s32 %s19, 2
        // Predicated region
        $region69: #{tpu_custom_call.1} parent=67 // pred_check
          %p1148 = pneg %p158
        $region70: #{tpu_custom_call.1} parent=67 // pred_check_branch
          %1150 = sbr.rel (%p1148) target = $region72
        $region71: #{tpu_custom_call.1} parent=67 // pred_region
          %s1151 = sand.u32 %s143, 1
          %s1152 = scalar_lea.sflag [#allocation4], %s1151
          %s1153 = sand.u32 %s143, 1
          %s1154 = smul.addr %s1153, 24
          %s1155 = scalar_lea.vmem [#allocation11], %s1154
          %1157 = dma.done %s1152, 384
        $region72: #{tpu_custom_call.1} parent=67 // pred_fallthru
          _
      $region68: #{tpu_custom_call.1} parent=5 // pred_fallthru
        _
    $region6: #{tpu_custom_call.1} parent=1 // loop_footer
      %s23 = sadd.s32 1, %s19
    $region7: #{tpu_custom_call.1} parent=1 // loop_footer_branch
      %18 = sbr.rel target = $region3
    $region8: #{tpu_custom_call.1} parent=1 // loop_exit
      _
    %1158 = vsyncpa [#allocation3], 1
    %s1159 = scalar_lea.sflag [#allocation3], 1
    %1160 = vsyncpa %s1159, 1
    %1161 = vsyncpa [#allocation6], 1
    %1162 = vsyncpa [#allocation9], 1
    %1163 = vsyncpa [#allocation4], 1
    %s1164 = scalar_lea.sflag [#allocation4], 1
    %1165 = vsyncpa %s1164, 1

</llo_original>
